<compile_context>
chip_gen: v5e
topology: v5e:2x2
jax: 0.10.0
libtpu: 0.0.40
codegen_flags: <defaults>
</compile_context>

<pallas_src>
import functools

import jax
import jax.numpy as jnp
from jax.experimental import pallas as pl
from jax.experimental.pallas import tpu as pltpu


def actor_kernel(obs_ref, act_ref,
                 w1o_ref, w1a_ref, b1_ref,
                 w2_ref, b2_ref,
                 w3_ref, b3_ref,
                 out_ref,
                 *, phi_scale, clip):
    """One batch tile of the full Actor forward. Weights bf16, accum f32."""
    obs = obs_ref[...]                       # (tb, obs_dim)    f32
    act = act_ref[...]                       # (tb, action_dim) f32

    obs_b = obs.astype(jnp.bfloat16)
    act_b = act.astype(jnp.bfloat16)

    # Linear(obs_dim + action_dim, 400) + ReLU; concat folded into two matmuls.
    h1 = (jnp.dot(obs_b, w1o_ref[...], preferred_element_type=jnp.float32)
          + jnp.dot(act_b, w1a_ref[...], preferred_element_type=jnp.float32)
          + b1_ref[...])
    h1 = jnp.maximum(h1, 0.0)

    # Linear(400, 300) -- no activation (matches the PyTorch Sequential).
    h2 = (jnp.dot(h1.astype(jnp.bfloat16), w2_ref[...],
                  preferred_element_type=jnp.float32)
          + b2_ref[...])

    # Linear(300, action_dim) + Tanh.
    p = jnp.tanh(jnp.dot(h2.astype(jnp.bfloat16), w3_ref[...],
                         preferred_element_type=jnp.float32)
                 + b3_ref[...])

    out = phi_scale * p + act                # phi_scale = phi * clip_action
    out_ref[...] = jnp.clip(out, -clip, clip).astype(out_ref.dtype)


def prepare_actor_params(params, obs_dim):
    """One-time prep: split W1 rows and cast weights to bf16 (biases stay f32)."""
    w1 = params["w1"]
    return {
        "w1o": w1[:obs_dim, :].astype(jnp.bfloat16),
        "w1a": w1[obs_dim:, :].astype(jnp.bfloat16),
        "b1": params["b1"][None, :].astype(jnp.float32),
        "w2": params["w2"].astype(jnp.bfloat16),
        "b2": params["b2"][None, :].astype(jnp.float32),
        "w3": params["w3"].astype(jnp.bfloat16),
        "b3": params["b3"][None, :].astype(jnp.float32),
    }


def _round_up(x, m):
    return ((x + m - 1) // m) * m


def actor_forward(obs, action, prep, phi, clip_action, *, block_b=1024):
    """obs: [B, obs_dim] f32, action: [B, action_dim] f32 -> [B, action_dim] f32."""
    B, obs_dim = obs.shape
    action_dim = action.shape[-1]

    # Batch tiling:
    #  * B <= 8: one full-extent block (satisfies the (8,128) rule via "equal
    #    full array dim", no padding needed).
    #  * otherwise: tile of min(block_b, round_up(cdiv(B,2),8)) rows — always
    #    a multiple of 8 and always >= 2 grid steps, so v7x can shard the
    #    "parallel" batch axis across both TensorCores. The last block may be
    #    ragged; Pallas masks its stores (no wrapper pad / slice copies).
    if B <= 8:
        tb = B
    else:
        tb = min(block_b, _round_up(pl.cdiv(B, 2), 8))
    grid = (pl.cdiv(B, tb),)

    def batch_spec(feat):
        return pl.BlockSpec((tb, feat), lambda i: (i, 0))

    def const_spec(shape):
        # Whole-array block, constant index -> weights stay VMEM-resident
        # across batch tiles (not re-DMA'd per grid step).
        return pl.BlockSpec(shape, lambda i: (0, 0))

    # phi / clip_action are fixed Python-float hyperparameters here, so baking
    # them into the closure is the fastest option (no SMEM DMA). NOTE: if they
    # were traced / per-call values this would recompile — pass via SMEM then.
    kernel = functools.partial(
        actor_kernel,
        phi_scale=float(phi) * float(clip_action),
        clip=float(clip_action),
    )

    out = pl.pallas_call(
        kernel,
        out_shape=jax.ShapeDtypeStruct((B, action_dim), jnp.float32),
        grid_spec=pltpu.PrefetchScalarGridSpec(
            num_scalar_prefetch=0,
            grid=grid,
            in_specs=[
                batch_spec(obs_dim),
                batch_spec(action_dim),
                const_spec(prep["w1o"].shape),
                const_spec(prep["w1a"].shape),
                const_spec(prep["b1"].shape),
                const_spec(prep["w2"].shape),
                const_spec(prep["b2"].shape),
                const_spec(prep["w3"].shape),
                const_spec(prep["b3"].shape),
            ],
            out_specs=batch_spec(action_dim),
        ),
        compiler_params=pltpu.CompilerParams(
            # v7x: 2 TCs split the batch; others treat it as a plain loop.
            dimension_semantics=("parallel",),
            # Raised so large tiles also compile on v5e (16 MiB default there);
            # well under physical VMEM on every generation.
            vmem_limit_bytes=48 * 1024 * 1024,
        ),
    )(obs, action, prep["w1o"], prep["w1a"], prep["b1"],
      prep["w2"], prep["b2"], prep["w3"], prep["b3"])

    return out


def init_params(key, obs_dim, action_dim):
    """Deterministic init mimicking nn.Linear defaults (U(-1/sqrt(fan_in), +))."""
    in_dim = obs_dim + action_dim
    h1, h2 = 400, 300
    ks = jax.random.split(key, 6)

    def lin(kw, kb, fan_in, fan_out):
        bound = 1.0 / jnp.sqrt(fan_in)
        w = jax.random.uniform(kw, (fan_in, fan_out), jnp.float32, -bound, bound)
        b = jax.random.uniform(kb, (fan_out,), jnp.float32, -bound, bound)
        return w, b

    w1, b1 = lin(ks[0], ks[1], in_dim, h1)
    w2, b2 = lin(ks[2], ks[3], h1, h2)
    w3, b3 = lin(ks[4], ks[5], h2, action_dim)
    return {"w1": w1, "b1": b1, "w2": w2, "b2": b2, "w3": w3, "b3": b3}


def ref_forward_f32(obs, action, params, phi, clip_action):
    x = jnp.concatenate([obs, action], axis=-1)
    h1 = jnp.maximum(x @ params["w1"] + params["b1"], 0.0)
    h2 = h1 @ params["w2"] + params["b2"]
    p = jnp.tanh(h2 @ params["w3"] + params["b3"])
    return jnp.clip(phi * p * clip_action + action, -clip_action, clip_action)


def ref_forward_bf16(obs, action, prep, phi, clip_action):
    """Same bf16-weight / f32-accum computation as the kernel, in plain JAX."""
    h1 = (jnp.dot(obs.astype(jnp.bfloat16), prep["w1o"],
                  preferred_element_type=jnp.float32)
          + jnp.dot(action.astype(jnp.bfloat16), prep["w1a"],
                    preferred_element_type=jnp.float32)
          + prep["b1"])
    h1 = jnp.maximum(h1, 0.0)
    h2 = jnp.dot(h1.astype(jnp.bfloat16), prep["w2"],
                 preferred_element_type=jnp.float32) + prep["b2"]
    p = jnp.tanh(jnp.dot(h2.astype(jnp.bfloat16), prep["w3"],
                         preferred_element_type=jnp.float32) + prep["b3"])
    return jnp.clip(phi * clip_action * p + action, -clip_action, clip_action)


if __name__ == "__main__":
    key = jax.random.PRNGKey(0)
    k_obs, k_act, k_par, k_obs2, k_act2 = jax.random.split(key, 5)

    batch = 2
    obs_dim = 16
    action_dim = 4
    phi = 0.05
    clip_action = 1.0

    obs = jax.random.normal(k_obs, (batch, obs_dim), jnp.float32)
    action = jax.random.uniform(k_act, (batch, action_dim), jnp.float32,
                                -clip_action, clip_action)
    params = init_params(k_par, obs_dim, action_dim)
    prep = prepare_actor_params(params, obs_dim)      # one-time: split + bf16 cast

    # --- small batch (single full-extent block) ---
    out = actor_forward(obs, action, prep, phi, clip_action)
    jax.block_until_ready(out)
    assert out.shape == (batch, action_dim)

    ref_b = ref_forward_bf16(obs, action, prep, phi, clip_action)
    ref_f = ref_forward_f32(obs, action, params, phi, clip_action)
    assert jnp.max(jnp.abs(out - ref_b)) < 1e-3, "mismatch vs bf16 reference"
    assert jnp.max(jnp.abs(out - ref_f)) < 5e-3, "mismatch vs f32 reference"

    # --- larger batch exercising the 2-step parallel grid + ragged tail block ---
    B2 = 300
    obs2 = jax.random.normal(k_obs2, (B2, obs_dim), jnp.float32)
    act2 = jax.random.uniform(k_act2, (B2, action_dim), jnp.float32,
                              -clip_action, clip_action)
    out2 = actor_forward(obs2, act2, prep, phi, clip_action)
    jax.block_until_ready(out2)
    assert out2.shape == (B2, action_dim)

    ref2_b = ref_forward_bf16(obs2, act2, prep, phi, clip_action)
    ref2_f = ref_forward_f32(obs2, act2, params, phi, clip_action)
    assert jnp.max(jnp.abs(out2 - ref2_b)) < 1e-3, "tiled mismatch vs bf16 reference"
    assert jnp.max(jnp.abs(out2 - ref2_f)) < 5e-3, "tiled mismatch vs f32 reference"

    print("KERNEL_OK")
</pallas_src>

<mosaic_0001>
module attributes {stable_mosaic.version = 11 : i64} {
  func.func @actor_kernel(%arg0: i32, %arg1: memref<2x16xf32, #tpu.memory_space<vmem>>, %arg2: memref<2x4xf32, #tpu.memory_space<vmem>>, %arg3: memref<16x400xbf16, #tpu.memory_space<vmem>>, %arg4: memref<4x400xbf16, #tpu.memory_space<vmem>>, %arg5: memref<1x400xf32, #tpu.memory_space<vmem>>, %arg6: memref<400x300xbf16, #tpu.memory_space<vmem>>, %arg7: memref<1x300xf32, #tpu.memory_space<vmem>>, %arg8: memref<300x4xbf16, #tpu.memory_space<vmem>>, %arg9: memref<1x4xf32, #tpu.memory_space<vmem>>, %arg10: memref<2x4xf32, #tpu.memory_space<vmem>>) attributes {dimension_semantics = [#tpu.dimension_semantics<parallel>], iteration_bounds = array<i64: 1>, scalar_prefetch = 0 : i64, scratch_operands = 0 : i64, tpu.core_type = #tpu.core_type<tc>, window_params = [{transform_indices = @transform_0, window_bounds = array<i64: 2, 16>}, {transform_indices = @transform_1, window_bounds = array<i64: 2, 4>}, {pipeline_mode = #tpu.pipeline_mode<synchronous>, transform_indices = @transform_2, window_bounds = array<i64: 16, 400>}, {pipeline_mode = #tpu.pipeline_mode<synchronous>, transform_indices = @transform_3, window_bounds = array<i64: 4, 400>}, {pipeline_mode = #tpu.pipeline_mode<synchronous>, transform_indices = @transform_4, window_bounds = array<i64: 1, 400>}, {pipeline_mode = #tpu.pipeline_mode<synchronous>, transform_indices = @transform_5, window_bounds = array<i64: 400, 300>}, {pipeline_mode = #tpu.pipeline_mode<synchronous>, transform_indices = @transform_6, window_bounds = array<i64: 1, 300>}, {pipeline_mode = #tpu.pipeline_mode<synchronous>, transform_indices = @transform_7, window_bounds = array<i64: 300, 4>}, {pipeline_mode = #tpu.pipeline_mode<synchronous>, transform_indices = @transform_8, window_bounds = array<i64: 1, 4>}, {transform_indices = @transform_9, window_bounds = array<i64: 2, 4>}]} {
    %c0 = arith.constant 0 : index
    %c0_0 = arith.constant 0 : index
    %0 = vector.load %arg1[%c0, %c0_0] : memref<2x16xf32, #tpu.memory_space<vmem>>, vector<2x16xf32>
    %c0_1 = arith.constant 0 : index
    %c0_2 = arith.constant 0 : index
    %1 = vector.load %arg2[%c0_1, %c0_2] : memref<2x4xf32, #tpu.memory_space<vmem>>, vector<2x4xf32>
    %2 = arith.truncf %0 : vector<2x16xf32> to vector<2x16xbf16>
    %3 = arith.truncf %1 : vector<2x4xf32> to vector<2x4xbf16>
    %c0_3 = arith.constant 0 : index
    %c0_4 = arith.constant 0 : index
    %4 = vector.load %arg3[%c0_3, %c0_4] : memref<16x400xbf16, #tpu.memory_space<vmem>>, vector<16x400xbf16>
    %cst = arith.constant dense<0.000000e+00> : vector<2x400xf32>
    %5 = tpu.matmul %2, %4, %cst {dimension_numbers = #tpu.dot_dimension_numbers<[1], [0], [0], [1], [0, 0, 1, 1], [], []>} : vector<2x16xbf16>, vector<16x400xbf16>, vector<2x400xf32> -> vector<2x400xf32>
    %c0_5 = arith.constant 0 : index
    %c0_6 = arith.constant 0 : index
    %6 = vector.load %arg4[%c0_5, %c0_6] : memref<4x400xbf16, #tpu.memory_space<vmem>>, vector<4x400xbf16>
    %cst_7 = arith.constant dense<0.000000e+00> : vector<2x400xf32>
    %7 = tpu.matmul %3, %6, %cst_7 {dimension_numbers = #tpu.dot_dimension_numbers<[1], [0], [0], [1], [0, 0, 1, 1], [], []>} : vector<2x4xbf16>, vector<4x400xbf16>, vector<2x400xf32> -> vector<2x400xf32>
    %8 = arith.addf %5, %7 : vector<2x400xf32>
    %c0_8 = arith.constant 0 : index
    %c0_9 = arith.constant 0 : index
    %9 = vector.load %arg5[%c0_8, %c0_9] : memref<1x400xf32, #tpu.memory_space<vmem>>, vector<1x400xf32>
    %10 = vector.broadcast %9 : vector<1x400xf32> to vector<2x400xf32>
    %11 = arith.addf %8, %10 : vector<2x400xf32>
    %cst_10 = arith.constant 0.000000e+00 : f32
    %12 = vector.broadcast %cst_10 : f32 to vector<2x400xf32>
    %13 = arith.maximumf %11, %12 : vector<2x400xf32>
    %14 = arith.truncf %13 : vector<2x400xf32> to vector<2x400xbf16>
    %c0_11 = arith.constant 0 : index
    %c0_12 = arith.constant 0 : index
    %15 = vector.load %arg6[%c0_11, %c0_12] : memref<400x300xbf16, #tpu.memory_space<vmem>>, vector<400x300xbf16>
    %cst_13 = arith.constant dense<0.000000e+00> : vector<2x300xf32>
    %16 = tpu.matmul %14, %15, %cst_13 {dimension_numbers = #tpu.dot_dimension_numbers<[1], [0], [0], [1], [0, 0, 1, 1], [], []>} : vector<2x400xbf16>, vector<400x300xbf16>, vector<2x300xf32> -> vector<2x300xf32>
    %c0_14 = arith.constant 0 : index
    %c0_15 = arith.constant 0 : index
    %17 = vector.load %arg7[%c0_14, %c0_15] : memref<1x300xf32, #tpu.memory_space<vmem>>, vector<1x300xf32>
    %18 = vector.broadcast %17 : vector<1x300xf32> to vector<2x300xf32>
    %19 = arith.addf %16, %18 : vector<2x300xf32>
    %20 = arith.truncf %19 : vector<2x300xf32> to vector<2x300xbf16>
    %c0_16 = arith.constant 0 : index
    %c0_17 = arith.constant 0 : index
    %21 = vector.load %arg8[%c0_16, %c0_17] : memref<300x4xbf16, #tpu.memory_space<vmem>>, vector<300x4xbf16>
    %cst_18 = arith.constant dense<0.000000e+00> : vector<2x4xf32>
    %22 = tpu.matmul %20, %21, %cst_18 {dimension_numbers = #tpu.dot_dimension_numbers<[1], [0], [0], [1], [0, 0, 1, 1], [], []>} : vector<2x300xbf16>, vector<300x4xbf16>, vector<2x4xf32> -> vector<2x4xf32>
    %c0_19 = arith.constant 0 : index
    %c0_20 = arith.constant 0 : index
    %23 = vector.load %arg9[%c0_19, %c0_20] : memref<1x4xf32, #tpu.memory_space<vmem>>, vector<1x4xf32>
    %24 = vector.broadcast %23 : vector<1x4xf32> to vector<2x4xf32>
    %25 = arith.addf %22, %24 : vector<2x4xf32>
    %26 = math.tanh %25 : vector<2x4xf32>
    %cst_21 = arith.constant 5.000000e-02 : f32
    %27 = vector.broadcast %cst_21 : f32 to vector<2x4xf32>
    %28 = arith.mulf %27, %26 : vector<2x4xf32>
    %29 = arith.addf %28, %1 : vector<2x4xf32>
    %cst_22 = arith.constant -1.000000e+00 : f32
    %cst_23 = arith.constant 1.000000e+00 : f32
    %30 = vector.broadcast %cst_22 : f32 to vector<2x4xf32>
    %31 = arith.maximumf %30, %29 : vector<2x4xf32>
    %32 = vector.broadcast %cst_23 : f32 to vector<2x4xf32>
    %33 = arith.minimumf %32, %31 : vector<2x4xf32>
    %c0_24 = arith.constant 0 : index
    %c0_25 = arith.constant 0 : index
    %34 = vector.load %arg10[%c0_24, %c0_25] : memref<2x4xf32, #tpu.memory_space<vmem>>, vector<2x4xf32>
    tpu.vector_store %arg10[%c0_24, %c0_25], %33 {strides = array<i32>} : memref<2x4xf32, #tpu.memory_space<vmem>>, vector<2x4xf32>,
    return
  }
  func.func @transform_0(%arg0: i32) -> (i32, i32) {
    %c0_i32 = arith.constant 0 : i32
    %c0_i32_0 = arith.constant 0 : i32
    return %arg0, %c0_i32 : i32, i32
  }
  func.func @transform_1(%arg0: i32) -> (i32, i32) {
    %c0_i32 = arith.constant 0 : i32
    %c0_i32_0 = arith.constant 0 : i32
    return %arg0, %c0_i32 : i32, i32
  }
  func.func @transform_2(%arg0: i32) -> (i32, i32) {
    %c0_i32 = arith.constant 0 : i32
    %c0_i32_0 = arith.constant 0 : i32
    %c0_i32_1 = arith.constant 0 : i32
    return %c0_i32, %c0_i32_0 : i32, i32
  }
  func.func @transform_3(%arg0: i32) -> (i32, i32) {
    %c0_i32 = arith.constant 0 : i32
    %c0_i32_0 = arith.constant 0 : i32
    %c0_i32_1 = arith.constant 0 : i32
    return %c0_i32, %c0_i32_0 : i32, i32
  }
  func.func @transform_4(%arg0: i32) -> (i32, i32) {
    %c0_i32 = arith.constant 0 : i32
    %c0_i32_0 = arith.constant 0 : i32
    %c0_i32_1 = arith.constant 0 : i32
    return %c0_i32, %c0_i32_0 : i32, i32
  }
  func.func @transform_5(%arg0: i32) -> (i32, i32) {
    %c0_i32 = arith.constant 0 : i32
    %c0_i32_0 = arith.constant 0 : i32
    %c0_i32_1 = arith.constant 0 : i32
    return %c0_i32, %c0_i32_0 : i32, i32
  }
  func.func @transform_6(%arg0: i32) -> (i32, i32) {
    %c0_i32 = arith.constant 0 : i32
    %c0_i32_0 = arith.constant 0 : i32
    %c0_i32_1 = arith.constant 0 : i32
    return %c0_i32, %c0_i32_0 : i32, i32
  }
  func.func @transform_7(%arg0: i32) -> (i32, i32) {
    %c0_i32 = arith.constant 0 : i32
    %c0_i32_0 = arith.constant 0 : i32
    %c0_i32_1 = arith.constant 0 : i32
    return %c0_i32, %c0_i32_0 : i32, i32
  }
  func.func @transform_8(%arg0: i32) -> (i32, i32) {
    %c0_i32 = arith.constant 0 : i32
    %c0_i32_0 = arith.constant 0 : i32
    %c0_i32_1 = arith.constant 0 : i32
    return %c0_i32, %c0_i32_0 : i32, i32
  }
  func.func @transform_9(%arg0: i32) -> (i32, i32) {
    %c0_i32 = arith.constant 0 : i32
    %c0_i32_0 = arith.constant 0 : i32
    return %arg0, %c0_i32 : i32, i32
  }
}

</mosaic_0001>

<llo_original>
// kernel: tpu_custom_call.1
$region0: #{tpu_custom_call.1}
  #allocation0 [shape = 'u32[]', space=smem, size = 0x4, offset = 0x4, fixed_abs, tag = 'smem constant byte address 0x4 - core index']
  #allocation1 [shape = 'u32[72,128]{1,0:T(1,128)}', space=vmem, size = 0x9000, scoped, tag = 'internal scratch']
  %s0 = inlined_call_operand.vmem [shape: f32[2,16], index: 0, kind: input, shape index: {}]
  %s1 = inlined_call_operand.vmem [shape: f32[2,4], index: 1, kind: input, shape index: {}]
  %s2 = inlined_call_operand.vmem [shape: bf16[16,400], index: 2, kind: input, shape index: {}]
  %s3 = inlined_call_operand.vmem [shape: bf16[4,400], index: 3, kind: input, shape index: {}]
  %s4 = inlined_call_operand.vmem [shape: f32[1,400], index: 4, kind: input, shape index: {}]
  %s5 = inlined_call_operand.hbm [shape: bf16[400,300], index: 5, kind: input, shape index: {}]
  %s6 = inlined_call_operand.vmem [shape: f32[1,300], index: 6, kind: input, shape index: {}]
  %s7 = inlined_call_operand.vmem [shape: bf16[300,4], index: 7, kind: input, shape index: {}]
  %s8 = inlined_call_operand.vmem [shape: f32[1,4], index: 8, kind: input, shape index: {}]
  %s9 = inlined_call_operand.hbm [shape: f32[2,4], index: 9, kind: output, shape index: {}]
  %s10 = sld [smem:[#allocation0]]
  $region50: #{tpu_custom_call.1} parent=0
    _
  %s12 = ssub.s32 1, %s10
  %s13 = scalar_select 0, %s12, %s10
  $region1: #{tpu_custom_call.1} parent=0
    #allocation2 [shape = 'u8[307200]{0}', space=vmem, size = 0x4b000, scoped, tag = 'input window, operand 5, single buffered']
    #allocation3 [shape = 's32[1]{0}', space=sflag, size = 0x4, scoped, tag = 'scoped memory for tpu_custom_call.1']
    #allocation4 [shape = 's32[1]{0}', space=sflag, size = 0x4, scoped, tag = 'scoped memory for tpu_custom_call.1']
    #allocation5 [shape = 'u8[1024]{0}', space=vmem, size = 0x400, scoped, tag = 'output window, operand 0, single buffered']
    %14 = vsyncpa [#allocation3], 0
    %15 = vsyncpa [#allocation4], 0
    // Predicated region
    $region2: #{tpu_custom_call.1} parent=1 // pred_check
      _
    $region3: #{tpu_custom_call.1} parent=1 // pred_check_branch
      %17 = sbr.rel (0) target = $region5
    $region4: #{tpu_custom_call.1} parent=1 // pred_region
      _
    $region5: #{tpu_custom_call.1} parent=1 // pred_fallthru
      _
    // Predicated region
    $region6: #{tpu_custom_call.1} parent=1 // pred_check
      _
    $region7: #{tpu_custom_call.1} parent=1 // pred_check_branch
      %19 = sbr.rel (0) target = $region9
    $region8: #{tpu_custom_call.1} parent=1 // pred_region
      _
    $region9: #{tpu_custom_call.1} parent=1 // pred_fallthru
      _
    // Predicated region
    $region10: #{tpu_custom_call.1} parent=1 // pred_check
      _
    $region11: #{tpu_custom_call.1} parent=1 // pred_check_branch
      %21 = sbr.rel (0) target = $region13
    $region12: #{tpu_custom_call.1} parent=1 // pred_region
      _
    $region13: #{tpu_custom_call.1} parent=1 // pred_fallthru
      _
    // Predicated region
    $region14: #{tpu_custom_call.1} parent=1 // pred_check
      _
    $region15: #{tpu_custom_call.1} parent=1 // pred_check_branch
      %23 = sbr.rel (0) target = $region17
    $region16: #{tpu_custom_call.1} parent=1 // pred_region
      _
    $region17: #{tpu_custom_call.1} parent=1 // pred_fallthru
      _
    // Predicated region
    $region18: #{tpu_custom_call.1} parent=1 // pred_check
      _
    $region19: #{tpu_custom_call.1} parent=1 // pred_check_branch
      %25 = sbr.rel (0) target = $region21
    $region20: #{tpu_custom_call.1} parent=1 // pred_region
      _
    $region21: #{tpu_custom_call.1} parent=1 // pred_fallthru
      _
    // Predicated region
    $region22: #{tpu_custom_call.1} parent=1 // pred_check
      _
    $region23: #{tpu_custom_call.1} parent=1 // pred_check_branch
      %27 = sbr.rel (0) target = $region25
    $region24: #{tpu_custom_call.1} parent=1 // pred_region
      %29 = vsyncadd [#allocation3], 0
      %s30 = sshll.u32 %s5, 4
      %s31 = int_to_ptr.hbm [resolvable:$true] %s30
      %s32 = sshll.u32 [#allocation2], 4
      %s33 = int_to_ptr.vmem [resolvable:$true] %s32
      %38 = dma.hbm_to_vmem [thread:$0]  %s31, 9600, %s33, [#allocation3], 192, 192, 12
    $region25: #{tpu_custom_call.1} parent=1 // pred_fallthru
      _
    // Predicated region
    $region26: #{tpu_custom_call.1} parent=1 // pred_check
      _
    $region27: #{tpu_custom_call.1} parent=1 // pred_check_branch
      %40 = sbr.rel (0) target = $region29
    $region28: #{tpu_custom_call.1} parent=1 // pred_region
      _
    $region29: #{tpu_custom_call.1} parent=1 // pred_fallthru
      _
    // Predicated region
    $region30: #{tpu_custom_call.1} parent=1 // pred_check
      _
    $region31: #{tpu_custom_call.1} parent=1 // pred_check_branch
      %42 = sbr.rel (0) target = $region33
    $region32: #{tpu_custom_call.1} parent=1 // pred_region
      _
    $region33: #{tpu_custom_call.1} parent=1 // pred_fallthru
      _
    // Predicated region
    $region34: #{tpu_custom_call.1} parent=1 // pred_check
      _
    $region35: #{tpu_custom_call.1} parent=1 // pred_check_branch
      %44 = sbr.rel (0) target = $region37
    $region36: #{tpu_custom_call.1} parent=1 // pred_region
      _
    $region37: #{tpu_custom_call.1} parent=1 // pred_fallthru
      _
    // Predicated region
    $region38: #{tpu_custom_call.1} parent=1 // pred_check
      _
    $region39: #{tpu_custom_call.1} parent=1 // pred_check_branch
      %46 = sbr.rel (0) target = $region41
    $region40: #{tpu_custom_call.1} parent=1 // pred_region
      %48 = dma.done [#allocation3], 9600
    $region41: #{tpu_custom_call.1} parent=1 // pred_fallthru
      _
    %v50 = vld [vmem:[%s0] sm:$0x3]
    %v51 = vld [vmem:[%s1] sm:$0x3]
    %v52 = vpack.c.bf16 %v50, %v50
    %v53 = vpack.c.bf16 %v51, %v51
    %v54 = vld [vmem:[%s2] sm:$0xff]
    %v55 = vld [vmem:[%s2 + $0x8] sm:$0xff]
    %v56 = vld [vmem:[%s2 + $0x10] sm:$0xff]
    %v57 = vld [vmem:[%s2 + $0x18] sm:$0xff]
    %v58 = vld [vmem:[%s3] sm:$0xff]
    %60 = vst [vmem:[#allocation1] ss:$4 sm:$0xff] %v58
    %v61 = vld.sshfl [vmem:[#allocation1] sm:$0xff pattern:$0x73625140]
    %v62 = vld.sshfl [vmem:[#allocation1 + $0x8] sm:$0xff pattern:$0x73625140]
    %v63 = vld.sshfl [vmem:[#allocation1 + $0x10] sm:$0xff pattern:$0x73625140]
    %v64 = vld.sshfl [vmem:[#allocation1 + $0x18] sm:$0xff pattern:$0x73625140]
    %vm65 = vcmask 31744
    %v67 = vsel %vm65, %v53, 0
    %vm69 = vcmask 1041408
    %v70 = vsel %vm69, %v61, 0
    %v72 = vsel %vm69, %v62, 0
    %v74 = vsel %vm69, %v63, 0
    %v76 = vsel %vm69, %v64, 0
    %78 = vmatpush.bf16.msra.mxu0 0
    %79 = vmatpush.bf16.msra.mxu0 0
    %80 = vmatpush.bf16.msra.mxu0 0
    %81 = vmatpush.bf16.msra.mxu0 0
    %82 = vmatpush.bf16.msra.mxu0 0
    %83 = vmatpush.bf16.msra.mxu0 0
    %84 = vmatpush.bf16.msra.mxu0 0
    %85 = vmatpush.bf16.msra.mxu0 %v70
    %86 = vmatmul.bf16.gmra.mxu0 %v67
    %v87 = vpop.f32.mrf.mxu0
    %v88 = vadd.f32 0.0, %v87
    %v89 = vpop.f32.mrf.mxu0
    %90 = vdwg.mxu0
    %91 = vmatpush.bf16.msra.mxu0 0
    %92 = vmatpush.bf16.msra.mxu0 0
    %93 = vmatpush.bf16.msra.mxu0 0
    %94 = vmatpush.bf16.msra.mxu0 0
    %95 = vmatpush.bf16.msra.mxu0 0
    %96 = vmatpush.bf16.msra.mxu0 0
    %97 = vmatpush.bf16.msra.mxu0 0
    %98 = vmatpush.bf16.msra.mxu0 %v72
    %99 = vmatmul.bf16.gmra.mxu0 %v67
    %v100 = vpop.f32.mrf.mxu0
    %v101 = vadd.f32 0.0, %v100
    %v102 = vpop.f32.mrf.mxu0
    %103 = vdwg.mxu0
    %104 = vmatpush.bf16.msra.mxu0 0
    %105 = vmatpush.bf16.msra.mxu0 0
    %106 = vmatpush.bf16.msra.mxu0 0
    %107 = vmatpush.bf16.msra.mxu0 0
    %108 = vmatpush.bf16.msra.mxu0 0
    %109 = vmatpush.bf16.msra.mxu0 0
    %110 = vmatpush.bf16.msra.mxu0 0
    %111 = vmatpush.bf16.msra.mxu0 %v74
    %112 = vmatmul.bf16.gmra.mxu0 %v67
    %v113 = vpop.f32.mrf.mxu0
    %v114 = vadd.f32 0.0, %v113
    %v115 = vpop.f32.mrf.mxu0
    %116 = vdwg.mxu0
    %117 = vmatpush.bf16.msra.mxu0 0
    %118 = vmatpush.bf16.msra.mxu0 0
    %119 = vmatpush.bf16.msra.mxu0 0
    %120 = vmatpush.bf16.msra.mxu0 0
    %121 = vmatpush.bf16.msra.mxu0 0
    %122 = vmatpush.bf16.msra.mxu0 0
    %123 = vmatpush.bf16.msra.mxu0 0
    %124 = vmatpush.bf16.msra.mxu0 %v76
    %125 = vmatmul.bf16.gmra.mxu0 %v67
    %v126 = vpop.f32.mrf.mxu0
    %v127 = vadd.f32 0.0, %v126
    %v128 = vpop.f32.mrf.mxu0
    %129 = vdwg.mxu0
    %v134 = vunpack.c.l.b16 %v54
    %v135 = vunpack.c.h.b16 %v54
    %v136 = vunpack.c.l.b16 %v55
    %v137 = vunpack.c.h.b16 %v55
    %v138 = vunpack.c.l.b16 %v56
    %v139 = vunpack.c.h.b16 %v56
    %v140 = vunpack.c.l.b16 %v57
    %v141 = vunpack.c.h.b16 %v57
    %v142 = vpack.c.b16 %v138, %v134
    %v143 = vpack.c.b16 %v139, %v135
    %v144 = vpack.c.b16 %v140, %v136
    %v145 = vpack.c.b16 %v141, %v137
    %vm150 = vcmask 130048
    %v152 = vsel %vm150, %v52, 0
    %154 = vmatpush.bf16.msra.mxu0 0
    %155 = vmatpush.bf16.msra.mxu0 0
    %156 = vmatpush.bf16.msra.mxu0 0
    %157 = vmatpush.bf16.msra.mxu0 0
    %158 = vmatpush.bf16.msra.mxu0 0
    %159 = vmatpush.bf16.msra.mxu0 0
    %160 = vmatpush.bf16.msra.mxu0 0
    %161 = vmatpush.bf16.msra.mxu0 %v142
    %162 = vmatmul.bf16.gmra.mxu0 %v152
    %v163 = vpop.f32.mrf.mxu0
    %v164 = vadd.f32 %v88, %v163
    %v165 = vpop.f32.mrf.mxu0
    %166 = vdwg.mxu0
    %167 = vmatpush.bf16.msra.mxu0 0
    %168 = vmatpush.bf16.msra.mxu0 0
    %169 = vmatpush.bf16.msra.mxu0 0
    %170 = vmatpush.bf16.msra.mxu0 0
    %171 = vmatpush.bf16.msra.mxu0 0
    %172 = vmatpush.bf16.msra.mxu0 0
    %173 = vmatpush.bf16.msra.mxu0 0
    %174 = vmatpush.bf16.msra.mxu0 %v143
    %175 = vmatmul.bf16.gmra.mxu0 %v152
    %v176 = vpop.f32.mrf.mxu0
    %v177 = vadd.f32 %v101, %v176
    %v178 = vpop.f32.mrf.mxu0
    %179 = vdwg.mxu0
    %180 = vmatpush.bf16.msra.mxu0 0
    %181 = vmatpush.bf16.msra.mxu0 0
    %182 = vmatpush.bf16.msra.mxu0 0
    %183 = vmatpush.bf16.msra.mxu0 0
    %184 = vmatpush.bf16.msra.mxu0 0
    %185 = vmatpush.bf16.msra.mxu0 0
    %186 = vmatpush.bf16.msra.mxu0 0
    %187 = vmatpush.bf16.msra.mxu0 %v144
    %188 = vmatmul.bf16.gmra.mxu0 %v152
    %v189 = vpop.f32.mrf.mxu0
    %v190 = vadd.f32 %v114, %v189
    %v191 = vpop.f32.mrf.mxu0
    %192 = vdwg.mxu0
    %193 = vmatpush.bf16.msra.mxu0 0
    %194 = vmatpush.bf16.msra.mxu0 0
    %195 = vmatpush.bf16.msra.mxu0 0
    %196 = vmatpush.bf16.msra.mxu0 0
    %197 = vmatpush.bf16.msra.mxu0 0
    %198 = vmatpush.bf16.msra.mxu0 0
    %199 = vmatpush.bf16.msra.mxu0 0
    %200 = vmatpush.bf16.msra.mxu0 %v145
    %201 = vmatmul.bf16.gmra.mxu0 %v152
    %v202 = vpop.f32.mrf.mxu0
    %v203 = vadd.f32 %v127, %v202
    %v204 = vpop.f32.mrf.mxu0
    %205 = vdwg.mxu0
    %v206 = vld [vmem:[%s4] sm:$0xf]
    %v208 = vperm.slane %v206, 0
    %v209 = vperm.slane %v206, 1
    %v210 = vperm.slane %v206, 2
    %v211 = vperm.slane %v206, 3
    %v216 = vadd.f32 %v164, %v208
    %v217 = vadd.f32 %v177, %v209
    %v218 = vadd.f32 %v190, %v210
    %v219 = vadd.f32 %v203, %v211
    %v220 = vmax.f32 %v216, 0.0
    %v221 = vmax.f32 %v217, 0.0
    %v222 = vmax.f32 %v218, 0.0
    %v223 = vmax.f32 %v219, 0.0
    %v224 = vpack.c.bf16 %v220, %v220
    %v225 = vpack.c.bf16 %v221, %v221
    %v226 = vpack.c.bf16 %v222, %v222
    %v227 = vpack.c.bf16 %v223, %v223
    %v228 = vld [vmem:[#allocation2] sm:$0xff]
    %v229 = vld [vmem:[#allocation2 + $0x8] sm:$0xf]
    %v230 = vld [vmem:[#allocation2 + $0xc] sm:$0xff]
    %v231 = vld [vmem:[#allocation2 + $0x14] sm:$0xf]
    %v232 = vld [vmem:[#allocation2 + $0x18] sm:$0xff]
    %v233 = vld [vmem:[#allocation2 + $0x20] sm:$0xf]
    %v234 = vld [vmem:[#allocation2 + $0x24] sm:$0xff]
    %v235 = vld [vmem:[#allocation2 + $0x2c] sm:$0xf]
    %v236 = vld [vmem:[#allocation2 + $0x30] sm:$0xff]
    %v237 = vld [vmem:[#allocation2 + $0x38] sm:$0xf]
    %v238 = vld [vmem:[#allocation2 + $0x3c] sm:$0xff]
    %v239 = vld [vmem:[#allocation2 + $0x44] sm:$0xf]
    %v240 = vld [vmem:[#allocation2 + $0x48] sm:$0xff]
    %v241 = vld [vmem:[#allocation2 + $0x50] sm:$0xf]
    %v242 = vld [vmem:[#allocation2 + $0x54] sm:$0xff]
    %v243 = vld [vmem:[#allocation2 + $0x5c] sm:$0xf]
    %v244 = vld [vmem:[#allocation2 + $0x60] sm:$0xff]
    %v245 = vld [vmem:[#allocation2 + $0x68] sm:$0xf]
    %v246 = vld [vmem:[#allocation2 + $0x6c] sm:$0xff]
    %v247 = vld [vmem:[#allocation2 + $0x74] sm:$0xf]
    %v248 = vld [vmem:[#allocation2 + $0x78] sm:$0xff]
    %v249 = vld [vmem:[#allocation2 + $0x80] sm:$0xf]
    %v250 = vld [vmem:[#allocation2 + $0x84] sm:$0xff]
    %v251 = vld [vmem:[#allocation2 + $0x8c] sm:$0xf]
    %v252 = vld [vmem:[#allocation2 + $0x90] sm:$0xff]
    %v253 = vld [vmem:[#allocation2 + $0x98] sm:$0xf]
    %v254 = vld [vmem:[#allocation2 + $0x9c] sm:$0xff]
    %v255 = vld [vmem:[#allocation2 + $0xa4] sm:$0xf]
    %v256 = vld [vmem:[#allocation2 + $0xa8] sm:$0xff]
    %v257 = vld [vmem:[#allocation2 + $0xb0] sm:$0xf]
    %v258 = vld [vmem:[#allocation2 + $0xb4] sm:$0xff]
    %v259 = vld [vmem:[#allocation2 + $0xbc] sm:$0xf]
    %v260 = vld [vmem:[#allocation2 + $0xc0] sm:$0xff]
    %v261 = vld [vmem:[#allocation2 + $0xc8] sm:$0xf]
    %v262 = vld [vmem:[#allocation2 + $0xcc] sm:$0xff]
    %v263 = vld [vmem:[#allocation2 + $0xd4] sm:$0xf]
    %v264 = vld [vmem:[#allocation2 + $0xd8] sm:$0xff]
    %v265 = vld [vmem:[#allocation2 + $0xe0] sm:$0xf]
    %v266 = vld [vmem:[#allocation2 + $0xe4] sm:$0xff]
    %v267 = vld [vmem:[#allocation2 + $0xec] sm:$0xf]
    %v268 = vld [vmem:[#allocation2 + $0xf0] sm:$0xff]
    %v269 = vld [vmem:[#allocation2 + $0xf8] sm:$0xf]
    %v270 = vld [vmem:[#allocation2 + $0xfc] sm:$0xff]
    %v271 = vld [vmem:[#allocation2 + $0x104] sm:$0xf]
    %v272 = vld [vmem:[#allocation2 + $0x108] sm:$0xff]
    %v273 = vld [vmem:[#allocation2 + $0x110] sm:$0xf]
    %v274 = vld [vmem:[#allocation2 + $0x114] sm:$0xff]
    %v275 = vld [vmem:[#allocation2 + $0x11c] sm:$0xf]
    %v276 = vld [vmem:[#allocation2 + $0x120] sm:$0xff]
    %v277 = vld [vmem:[#allocation2 + $0x128] sm:$0xf]
    %v278 = vld [vmem:[#allocation2 + $0x12c] sm:$0xff]
    %v279 = vld [vmem:[#allocation2 + $0x134] sm:$0xf]
    %v280 = vld [vmem:[#allocation2 + $0x138] sm:$0xff]
    %v281 = vld [vmem:[#allocation2 + $0x140] sm:$0xf]
    %v282 = vld [vmem:[#allocation2 + $0x144] sm:$0xff]
    %v283 = vld [vmem:[#allocation2 + $0x14c] sm:$0xf]
    %v284 = vld [vmem:[#allocation2 + $0x150] sm:$0xff]
    %v285 = vld [vmem:[#allocation2 + $0x158] sm:$0xf]
    %v286 = vld [vmem:[#allocation2 + $0x15c] sm:$0xff]
    %v287 = vld [vmem:[#allocation2 + $0x164] sm:$0xf]
    %v288 = vld [vmem:[#allocation2 + $0x168] sm:$0xff]
    %v289 = vld [vmem:[#allocation2 + $0x170] sm:$0xf]
    %v290 = vld [vmem:[#allocation2 + $0x174] sm:$0xff]
    %v291 = vld [vmem:[#allocation2 + $0x17c] sm:$0xf]
    %v292 = vld [vmem:[#allocation2 + $0x180] sm:$0xff]
    %v293 = vld [vmem:[#allocation2 + $0x188] sm:$0xf]
    %v294 = vld [vmem:[#allocation2 + $0x18c] sm:$0xff]
    %v295 = vld [vmem:[#allocation2 + $0x194] sm:$0xf]
    %v296 = vld [vmem:[#allocation2 + $0x198] sm:$0xff]
    %v297 = vld [vmem:[#allocation2 + $0x1a0] sm:$0xf]
    %v298 = vld [vmem:[#allocation2 + $0x1a4] sm:$0xff]
    %v299 = vld [vmem:[#allocation2 + $0x1ac] sm:$0xf]
    %v300 = vld [vmem:[#allocation2 + $0x1b0] sm:$0xff]
    %v301 = vld [vmem:[#allocation2 + $0x1b8] sm:$0xf]
    %v302 = vld [vmem:[#allocation2 + $0x1bc] sm:$0xff]
    %v303 = vld [vmem:[#allocation2 + $0x1c4] sm:$0xf]
    %v304 = vld [vmem:[#allocation2 + $0x1c8] sm:$0xff]
    %v305 = vld [vmem:[#allocation2 + $0x1d0] sm:$0xf]
    %v306 = vld [vmem:[#allocation2 + $0x1d4] sm:$0xff]
    %v307 = vld [vmem:[#allocation2 + $0x1dc] sm:$0xf]
    %v308 = vld [vmem:[#allocation2 + $0x1e0] sm:$0xff]
    %v309 = vld [vmem:[#allocation2 + $0x1e8] sm:$0xf]
    %v310 = vld [vmem:[#allocation2 + $0x1ec] sm:$0xff]
    %v311 = vld [vmem:[#allocation2 + $0x1f4] sm:$0xf]
    %v312 = vld [vmem:[#allocation2 + $0x1f8] sm:$0xff]
    %v313 = vld [vmem:[#allocation2 + $0x200] sm:$0xf]
    %v314 = vld [vmem:[#allocation2 + $0x204] sm:$0xff]
    %v315 = vld [vmem:[#allocation2 + $0x20c] sm:$0xf]
    %v316 = vld [vmem:[#allocation2 + $0x210] sm:$0xff]
    %v317 = vld [vmem:[#allocation2 + $0x218] sm:$0xf]
    %v318 = vld [vmem:[#allocation2 + $0x21c] sm:$0xff]
    %v319 = vld [vmem:[#allocation2 + $0x224] sm:$0xf]
    %v320 = vld [vmem:[#allocation2 + $0x228] sm:$0xff]
    %v321 = vld [vmem:[#allocation2 + $0x230] sm:$0xf]
    %v322 = vld [vmem:[#allocation2 + $0x234] sm:$0xff]
    %v323 = vld [vmem:[#allocation2 + $0x23c] sm:$0xf]
    %v324 = vld [vmem:[#allocation2 + $0x240] sm:$0xff]
    %v325 = vld [vmem:[#allocation2 + $0x248] sm:$0xf]
    %v326 = vld [vmem:[#allocation2 + $0x24c] sm:$0xff]
    %v327 = vld [vmem:[#allocation2 + $0x254] sm:$0xf]
    %v328 = vld [vmem:[%s6] sm:$0x7]
    %v330 = vperm.slane %v328, 0
    %v331 = vperm.slane %v328, 1
    %v332 = vperm.slane %v328, 2
    %v436 = vunpack.c.l.b16 %v228
    %v437 = vunpack.c.h.b16 %v228
    %v438 = vunpack.c.l.b16 %v229
    %v439 = vunpack.c.l.b16 %v230
    %v440 = vunpack.c.h.b16 %v230
    %v441 = vunpack.c.l.b16 %v231
    %v442 = vunpack.c.l.b16 %v232
    %v443 = vunpack.c.h.b16 %v232
    %v444 = vunpack.c.l.b16 %v233
    %v445 = vunpack.c.l.b16 %v234
    %v446 = vunpack.c.h.b16 %v234
    %v447 = vunpack.c.l.b16 %v235
    %v448 = vunpack.c.l.b16 %v236
    %v449 = vunpack.c.h.b16 %v236
    %v450 = vunpack.c.l.b16 %v237
    %v451 = vunpack.c.l.b16 %v238
    %v452 = vunpack.c.h.b16 %v238
    %v453 = vunpack.c.l.b16 %v239
    %v454 = vunpack.c.l.b16 %v240
    %v455 = vunpack.c.h.b16 %v240
    %v456 = vunpack.c.l.b16 %v241
    %v457 = vunpack.c.l.b16 %v242
    %v458 = vunpack.c.h.b16 %v242
    %v459 = vunpack.c.l.b16 %v243
    %v460 = vunpack.c.l.b16 %v244
    %v461 = vunpack.c.h.b16 %v244
    %v462 = vunpack.c.l.b16 %v245
    %v463 = vunpack.c.l.b16 %v246
    %v464 = vunpack.c.h.b16 %v246
    %v465 = vunpack.c.l.b16 %v247
    %v466 = vunpack.c.l.b16 %v248
    %v467 = vunpack.c.h.b16 %v248
    %v468 = vunpack.c.l.b16 %v249
    %v469 = vunpack.c.l.b16 %v250
    %v470 = vunpack.c.h.b16 %v250
    %v471 = vunpack.c.l.b16 %v251
    %v472 = vunpack.c.l.b16 %v252
    %v473 = vunpack.c.h.b16 %v252
    %v474 = vunpack.c.l.b16 %v253
    %v475 = vunpack.c.l.b16 %v254
    %v476 = vunpack.c.h.b16 %v254
    %v477 = vunpack.c.l.b16 %v255
    %v478 = vunpack.c.l.b16 %v256
    %v479 = vunpack.c.h.b16 %v256
    %v480 = vunpack.c.l.b16 %v257
    %v481 = vunpack.c.l.b16 %v258
    %v482 = vunpack.c.h.b16 %v258
    %v483 = vunpack.c.l.b16 %v259
    %v484 = vunpack.c.l.b16 %v260
    %v485 = vunpack.c.h.b16 %v260
    %v486 = vunpack.c.l.b16 %v261
    %v487 = vunpack.c.l.b16 %v262
    %v488 = vunpack.c.h.b16 %v262
    %v489 = vunpack.c.l.b16 %v263
    %v490 = vunpack.c.l.b16 %v264
    %v491 = vunpack.c.h.b16 %v264
    %v492 = vunpack.c.l.b16 %v265
    %v493 = vunpack.c.l.b16 %v266
    %v494 = vunpack.c.h.b16 %v266
    %v495 = vunpack.c.l.b16 %v267
    %v496 = vunpack.c.l.b16 %v268
    %v497 = vunpack.c.h.b16 %v268
    %v498 = vunpack.c.l.b16 %v269
    %v499 = vunpack.c.l.b16 %v270
    %v500 = vunpack.c.h.b16 %v270
    %v501 = vunpack.c.l.b16 %v271
    %v502 = vunpack.c.l.b16 %v272
    %v503 = vunpack.c.h.b16 %v272
    %v504 = vunpack.c.l.b16 %v273
    %v505 = vunpack.c.l.b16 %v274
    %v506 = vunpack.c.h.b16 %v274
    %v507 = vunpack.c.l.b16 %v275
    %v508 = vunpack.c.l.b16 %v276
    %v509 = vunpack.c.h.b16 %v276
    %v510 = vunpack.c.l.b16 %v277
    %v511 = vunpack.c.l.b16 %v278
    %v512 = vunpack.c.h.b16 %v278
    %v513 = vunpack.c.l.b16 %v279
    %v514 = vunpack.c.l.b16 %v280
    %v515 = vunpack.c.h.b16 %v280
    %v516 = vunpack.c.l.b16 %v281
    %v517 = vunpack.c.l.b16 %v282
    %v518 = vunpack.c.h.b16 %v282
    %v519 = vunpack.c.l.b16 %v283
    %v520 = vunpack.c.l.b16 %v284
    %v521 = vunpack.c.h.b16 %v284
    %v522 = vunpack.c.l.b16 %v285
    %v523 = vunpack.c.l.b16 %v286
    %v524 = vunpack.c.h.b16 %v286
    %v525 = vunpack.c.l.b16 %v287
    %v526 = vunpack.c.l.b16 %v288
    %v527 = vunpack.c.h.b16 %v288
    %v528 = vunpack.c.l.b16 %v289
    %v529 = vunpack.c.l.b16 %v290
    %v530 = vunpack.c.h.b16 %v290
    %v531 = vunpack.c.l.b16 %v291
    %v532 = vunpack.c.l.b16 %v292
    %v533 = vunpack.c.h.b16 %v292
    %v534 = vunpack.c.l.b16 %v293
    %v535 = vunpack.c.l.b16 %v294
    %v536 = vunpack.c.h.b16 %v294
    %v537 = vunpack.c.l.b16 %v295
    %v538 = vunpack.c.l.b16 %v296
    %v539 = vunpack.c.h.b16 %v296
    %v540 = vunpack.c.l.b16 %v297
    %v541 = vunpack.c.l.b16 %v298
    %v542 = vunpack.c.h.b16 %v298
    %v543 = vunpack.c.l.b16 %v299
    %v544 = vunpack.c.l.b16 %v300
    %v545 = vunpack.c.h.b16 %v300
    %v546 = vunpack.c.l.b16 %v301
    %v547 = vunpack.c.l.b16 %v302
    %v548 = vunpack.c.h.b16 %v302
    %v549 = vunpack.c.l.b16 %v303
    %v550 = vunpack.c.l.b16 %v304
    %v551 = vunpack.c.h.b16 %v304
    %v552 = vunpack.c.l.b16 %v305
    %v553 = vunpack.c.l.b16 %v306
    %v554 = vunpack.c.h.b16 %v306
    %v555 = vunpack.c.l.b16 %v307
    %v556 = vunpack.c.l.b16 %v308
    %v557 = vunpack.c.h.b16 %v308
    %v558 = vunpack.c.l.b16 %v309
    %v559 = vunpack.c.l.b16 %v310
    %v560 = vunpack.c.h.b16 %v310
    %v561 = vunpack.c.l.b16 %v311
    %v562 = vunpack.c.l.b16 %v312
    %v563 = vunpack.c.h.b16 %v312
    %v564 = vunpack.c.l.b16 %v313
    %v565 = vunpack.c.l.b16 %v314
    %v566 = vunpack.c.h.b16 %v314
    %v567 = vunpack.c.l.b16 %v315
    %v568 = vunpack.c.l.b16 %v316
    %v569 = vunpack.c.h.b16 %v316
    %v570 = vunpack.c.l.b16 %v317
    %v571 = vunpack.c.l.b16 %v318
    %v572 = vunpack.c.h.b16 %v318
    %v573 = vunpack.c.l.b16 %v319
    %v574 = vunpack.c.l.b16 %v320
    %v575 = vunpack.c.h.b16 %v320
    %v576 = vunpack.c.l.b16 %v321
    %v577 = vunpack.c.l.b16 %v322
    %v578 = vunpack.c.h.b16 %v322
    %v579 = vunpack.c.l.b16 %v323
    %v580 = vunpack.c.l.b16 %v324
    %v581 = vunpack.c.h.b16 %v324
    %v582 = vunpack.c.l.b16 %v325
    %v583 = vunpack.c.l.b16 %v326
    %v584 = vunpack.c.h.b16 %v326
    %v585 = vunpack.c.l.b16 %v327
    %v586 = vpack.c.b16 %v439, %v436
    %v587 = vpack.c.b16 %v440, %v437
    %v588 = vpack.c.b16 %v441, %v438
    %v589 = vpack.c.b16 %v445, %v442
    %v590 = vpack.c.b16 %v446, %v443
    %v591 = vpack.c.b16 %v447, %v444
    %v592 = vpack.c.b16 %v451, %v448
    %v593 = vpack.c.b16 %v452, %v449
    %v594 = vpack.c.b16 %v453, %v450
    %v595 = vpack.c.b16 %v457, %v454
    %v596 = vpack.c.b16 %v458, %v455
    %v597 = vpack.c.b16 %v459, %v456
    %v598 = vpack.c.b16 %v463, %v460
    %v599 = vpack.c.b16 %v464, %v461
    %v600 = vpack.c.b16 %v465, %v462
    %v601 = vpack.c.b16 %v469, %v466
    %v602 = vpack.c.b16 %v470, %v467
    %v603 = vpack.c.b16 %v471, %v468
    %v604 = vpack.c.b16 %v475, %v472
    %v605 = vpack.c.b16 %v476, %v473
    %v606 = vpack.c.b16 %v477, %v474
    %v607 = vpack.c.b16 %v481, %v478
    %v608 = vpack.c.b16 %v482, %v479
    %v609 = vpack.c.b16 %v483, %v480
    %v610 = vpack.c.b16 %v487, %v484
    %v611 = vpack.c.b16 %v488, %v485
    %v612 = vpack.c.b16 %v489, %v486
    %v613 = vpack.c.b16 %v493, %v490
    %v614 = vpack.c.b16 %v494, %v491
    %v615 = vpack.c.b16 %v495, %v492
    %v616 = vpack.c.b16 %v499, %v496
    %v617 = vpack.c.b16 %v500, %v497
    %v618 = vpack.c.b16 %v501, %v498
    %v619 = vpack.c.b16 %v505, %v502
    %v620 = vpack.c.b16 %v506, %v503
    %v621 = vpack.c.b16 %v507, %v504
    %v622 = vpack.c.b16 %v511, %v508
    %v623 = vpack.c.b16 %v512, %v509
    %v624 = vpack.c.b16 %v513, %v510
    %v625 = vpack.c.b16 %v517, %v514
    %v626 = vpack.c.b16 %v518, %v515
    %v627 = vpack.c.b16 %v519, %v516
    %v628 = vpack.c.b16 %v523, %v520
    %v629 = vpack.c.b16 %v524, %v521
    %v630 = vpack.c.b16 %v525, %v522
    %v631 = vpack.c.b16 %v529, %v526
    %v632 = vpack.c.b16 %v530, %v527
    %v633 = vpack.c.b16 %v531, %v528
    %v634 = vpack.c.b16 %v535, %v532
    %v635 = vpack.c.b16 %v536, %v533
    %v636 = vpack.c.b16 %v537, %v534
    %v637 = vpack.c.b16 %v541, %v538
    %v638 = vpack.c.b16 %v542, %v539
    %v639 = vpack.c.b16 %v543, %v540
    %v640 = vpack.c.b16 %v547, %v544
    %v641 = vpack.c.b16 %v548, %v545
    %v642 = vpack.c.b16 %v549, %v546
    %v643 = vpack.c.b16 %v553, %v550
    %v644 = vpack.c.b16 %v554, %v551
    %v645 = vpack.c.b16 %v555, %v552
    %v646 = vpack.c.b16 %v559, %v556
    %v647 = vpack.c.b16 %v560, %v557
    %v648 = vpack.c.b16 %v561, %v558
    %v649 = vpack.c.b16 %v565, %v562
    %v650 = vpack.c.b16 %v566, %v563
    %v651 = vpack.c.b16 %v567, %v564
    %v652 = vpack.c.b16 %v571, %v568
    %v653 = vpack.c.b16 %v572, %v569
    %v654 = vpack.c.b16 %v573, %v570
    %v655 = vpack.c.b16 %v577, %v574
    %v656 = vpack.c.b16 %v578, %v575
    %v657 = vpack.c.b16 %v579, %v576
    %v658 = vpack.c.b16 %v583, %v580
    %v659 = vpack.c.b16 %v584, %v581
    %v660 = vpack.c.b16 %v585, %v582
    %v737 = vsel %vm150, %v227, 0
    %739 = vmatpush.bf16.msra.mxu0 %v607
    %740 = vmatpush.bf16.msra.mxu0 %v604
    %741 = vmatpush.bf16.msra.mxu0 %v601
    %742 = vmatpush.bf16.msra.mxu0 %v598
    %743 = vmatpush.bf16.msra.mxu0 %v595
    %744 = vmatpush.bf16.msra.mxu0 %v592
    %745 = vmatpush.bf16.msra.mxu0 %v589
    %746 = vmatpush.bf16.msra.mxu0 %v586
    %747 = vmatmul.bf16.gmra.mxu0 %v224
    %v748 = vpop.f32.mrf.mxu0
    %v749 = vadd.f32 %v330, %v748
    %v750 = vpop.f32.mrf.mxu0
    %751 = vdwg.mxu0
    %752 = vmatpush.bf16.msra.mxu0 %v631
    %753 = vmatpush.bf16.msra.mxu0 %v628
    %754 = vmatpush.bf16.msra.mxu0 %v625
    %755 = vmatpush.bf16.msra.mxu0 %v622
    %756 = vmatpush.bf16.msra.mxu0 %v619
    %757 = vmatpush.bf16.msra.mxu0 %v616
    %758 = vmatpush.bf16.msra.mxu0 %v613
    %759 = vmatpush.bf16.msra.mxu0 %v610
    %760 = vmatmul.bf16.gmra.mxu0 %v225
    %v761 = vpop.f32.mrf.mxu0
    %v762 = vadd.f32 %v749, %v761
    %v763 = vpop.f32.mrf.mxu0
    %764 = vdwg.mxu0
    %765 = vmatpush.bf16.msra.mxu0 %v655
    %766 = vmatpush.bf16.msra.mxu0 %v652
    %767 = vmatpush.bf16.msra.mxu0 %v649
    %768 = vmatpush.bf16.msra.mxu0 %v646
    %769 = vmatpush.bf16.msra.mxu0 %v643
    %770 = vmatpush.bf16.msra.mxu0 %v640
    %771 = vmatpush.bf16.msra.mxu0 %v637
    %772 = vmatpush.bf16.msra.mxu0 %v634
    %773 = vmatmul.bf16.gmra.mxu0 %v226
    %v774 = vpop.f32.mrf.mxu0
    %v775 = vadd.f32 %v762, %v774
    %v776 = vpop.f32.mrf.mxu0
    %777 = vdwg.mxu0
    %778 = vmatpush.bf16.msra.mxu0 0
    %779 = vmatpush.bf16.msra.mxu0 0
    %780 = vmatpush.bf16.msra.mxu0 0
    %781 = vmatpush.bf16.msra.mxu0 0
    %782 = vmatpush.bf16.msra.mxu0 0
    %783 = vmatpush.bf16.msra.mxu0 0
    %784 = vmatpush.bf16.msra.mxu0 0
    %785 = vmatpush.bf16.msra.mxu0 %v658
    %786 = vmatmul.bf16.gmra.mxu0 %v737
    %v787 = vpop.f32.mrf.mxu0
    %v788 = vadd.f32 %v775, %v787
    %v789 = vpop.f32.mrf.mxu0
    %790 = vdwg.mxu0
    %791 = vmatpush.bf16.msra.mxu0 %v608
    %792 = vmatpush.bf16.msra.mxu0 %v605
    %793 = vmatpush.bf16.msra.mxu0 %v602
    %794 = vmatpush.bf16.msra.mxu0 %v599
    %795 = vmatpush.bf16.msra.mxu0 %v596
    %796 = vmatpush.bf16.msra.mxu0 %v593
    %797 = vmatpush.bf16.msra.mxu0 %v590
    %798 = vmatpush.bf16.msra.mxu0 %v587
    %799 = vmatmul.bf16.gmra.mxu0 %v224
    %v800 = vpop.f32.mrf.mxu0
    %v801 = vadd.f32 %v331, %v800
    %v802 = vpop.f32.mrf.mxu0
    %803 = vdwg.mxu0
    %804 = vmatpush.bf16.msra.mxu0 %v632
    %805 = vmatpush.bf16.msra.mxu0 %v629
    %806 = vmatpush.bf16.msra.mxu0 %v626
    %807 = vmatpush.bf16.msra.mxu0 %v623
    %808 = vmatpush.bf16.msra.mxu0 %v620
    %809 = vmatpush.bf16.msra.mxu0 %v617
    %810 = vmatpush.bf16.msra.mxu0 %v614
    %811 = vmatpush.bf16.msra.mxu0 %v611
    %812 = vmatmul.bf16.gmra.mxu0 %v225
    %v813 = vpop.f32.mrf.mxu0
    %v814 = vadd.f32 %v801, %v813
    %v815 = vpop.f32.mrf.mxu0
    %816 = vdwg.mxu0
    %817 = vmatpush.bf16.msra.mxu0 %v656
    %818 = vmatpush.bf16.msra.mxu0 %v653
    %819 = vmatpush.bf16.msra.mxu0 %v650
    %820 = vmatpush.bf16.msra.mxu0 %v647
    %821 = vmatpush.bf16.msra.mxu0 %v644
    %822 = vmatpush.bf16.msra.mxu0 %v641
    %823 = vmatpush.bf16.msra.mxu0 %v638
    %824 = vmatpush.bf16.msra.mxu0 %v635
    %825 = vmatmul.bf16.gmra.mxu0 %v226
    %v826 = vpop.f32.mrf.mxu0
    %v827 = vadd.f32 %v814, %v826
    %v828 = vpop.f32.mrf.mxu0
    %829 = vdwg.mxu0
    %830 = vmatpush.bf16.msra.mxu0 0
    %831 = vmatpush.bf16.msra.mxu0 0
    %832 = vmatpush.bf16.msra.mxu0 0
    %833 = vmatpush.bf16.msra.mxu0 0
    %834 = vmatpush.bf16.msra.mxu0 0
    %835 = vmatpush.bf16.msra.mxu0 0
    %836 = vmatpush.bf16.msra.mxu0 0
    %837 = vmatpush.bf16.msra.mxu0 %v659
    %838 = vmatmul.bf16.gmra.mxu0 %v737
    %v839 = vpop.f32.mrf.mxu0
    %v840 = vadd.f32 %v827, %v839
    %v841 = vpop.f32.mrf.mxu0
    %842 = vdwg.mxu0
    %843 = vmatpush.bf16.msra.mxu0 %v609
    %844 = vmatpush.bf16.msra.mxu0 %v606
    %845 = vmatpush.bf16.msra.mxu0 %v603
    %846 = vmatpush.bf16.msra.mxu0 %v600
    %847 = vmatpush.bf16.msra.mxu0 %v597
    %848 = vmatpush.bf16.msra.mxu0 %v594
    %849 = vmatpush.bf16.msra.mxu0 %v591
    %850 = vmatpush.bf16.msra.mxu0 %v588
    %851 = vmatmul.bf16.gmra.mxu0 %v224
    %v852 = vpop.f32.mrf.mxu0
    %v853 = vadd.f32 %v332, %v852
    %v854 = vpop.f32.mrf.mxu0
    %855 = vdwg.mxu0
    %856 = vmatpush.bf16.msra.mxu0 %v633
    %857 = vmatpush.bf16.msra.mxu0 %v630
    %858 = vmatpush.bf16.msra.mxu0 %v627
    %859 = vmatpush.bf16.msra.mxu0 %v624
    %860 = vmatpush.bf16.msra.mxu0 %v621
    %861 = vmatpush.bf16.msra.mxu0 %v618
    %862 = vmatpush.bf16.msra.mxu0 %v615
    %863 = vmatpush.bf16.msra.mxu0 %v612
    %864 = vmatmul.bf16.gmra.mxu0 %v225
    %v865 = vpop.f32.mrf.mxu0
    %v866 = vadd.f32 %v853, %v865
    %v867 = vpop.f32.mrf.mxu0
    %868 = vdwg.mxu0
    %869 = vmatpush.bf16.msra.mxu0 %v657
    %870 = vmatpush.bf16.msra.mxu0 %v654
    %871 = vmatpush.bf16.msra.mxu0 %v651
    %872 = vmatpush.bf16.msra.mxu0 %v648
    %873 = vmatpush.bf16.msra.mxu0 %v645
    %874 = vmatpush.bf16.msra.mxu0 %v642
    %875 = vmatpush.bf16.msra.mxu0 %v639
    %876 = vmatpush.bf16.msra.mxu0 %v636
    %877 = vmatmul.bf16.gmra.mxu0 %v226
    %v878 = vpop.f32.mrf.mxu0
    %v879 = vadd.f32 %v866, %v878
    %v880 = vpop.f32.mrf.mxu0
    %881 = vdwg.mxu0
    %882 = vmatpush.bf16.msra.mxu0 0
    %883 = vmatpush.bf16.msra.mxu0 0
    %884 = vmatpush.bf16.msra.mxu0 0
    %885 = vmatpush.bf16.msra.mxu0 0
    %886 = vmatpush.bf16.msra.mxu0 0
    %887 = vmatpush.bf16.msra.mxu0 0
    %888 = vmatpush.bf16.msra.mxu0 0
    %889 = vmatpush.bf16.msra.mxu0 %v660
    %890 = vmatmul.bf16.gmra.mxu0 %v737
    %v891 = vpop.f32.mrf.mxu0
    %v892 = vadd.f32 %v879, %v891
    %v893 = vpop.f32.mrf.mxu0
    %894 = vdwg.mxu0
    %v895 = vpack.c.bf16 %v788, %v788
    %v896 = vpack.c.bf16 %v840, %v840
    %v897 = vpack.c.bf16 %v892, %v892
    %v898 = vld [vmem:[%s7] sm:$0xf]
    %v899 = vld [vmem:[%s7 + $0x4] sm:$0xf]
    %v900 = vld [vmem:[%s7 + $0x8] sm:$0xf]
    %v901 = vld [vmem:[%s7 + $0xc] sm:$0xf]
    %v902 = vld [vmem:[%s7 + $0x10] sm:$0xf]
    %v903 = vld [vmem:[%s7 + $0x14] sm:$0xf]
    %v904 = vld [vmem:[%s7 + $0x18] sm:$0xf]
    %v905 = vld [vmem:[%s7 + $0x1c] sm:$0xf]
    %v906 = vld [vmem:[%s7 + $0x20] sm:$0xf]
    %v907 = vld [vmem:[%s7 + $0x24] sm:$0xf]
    %v908 = vld [vmem:[%s7 + $0x28] sm:$0xf]
    %v909 = vld [vmem:[%s7 + $0x2c] sm:$0xf]
    %v910 = vld [vmem:[%s7 + $0x30] sm:$0xf]
    %v911 = vld [vmem:[%s7 + $0x34] sm:$0xf]
    %v912 = vld [vmem:[%s7 + $0x38] sm:$0xf]
    %v913 = vld [vmem:[%s7 + $0x3c] sm:$0xf]
    %v914 = vld [vmem:[%s7 + $0x40] sm:$0xf]
    %v915 = vld [vmem:[%s7 + $0x44] sm:$0xf]
    %v916 = vld [vmem:[%s7 + $0x48] sm:$0xf]
    %v917 = vld [vmem:[%s7 + $0x4c] sm:$0xf]
    %v918 = vld [vmem:[%s7 + $0x50] sm:$0xf]
    %v919 = vld [vmem:[%s7 + $0x54] sm:$0xf]
    %v920 = vld [vmem:[%s7 + $0x58] sm:$0xf]
    %v921 = vld [vmem:[%s7 + $0x5c] sm:$0xf]
    %v922 = vld [vmem:[%s7 + $0x60] sm:$0xf]
    %v923 = vld [vmem:[%s7 + $0x64] sm:$0xf]
    %v924 = vld [vmem:[%s7 + $0x68] sm:$0xf]
    %v925 = vld [vmem:[%s7 + $0x6c] sm:$0xf]
    %v926 = vld [vmem:[%s7 + $0x70] sm:$0xf]
    %v927 = vld [vmem:[%s7 + $0x74] sm:$0xf]
    %v928 = vld [vmem:[%s7 + $0x78] sm:$0xf]
    %v929 = vld [vmem:[%s7 + $0x7c] sm:$0xf]
    %v930 = vld [vmem:[%s7 + $0x80] sm:$0xf]
    %v931 = vld [vmem:[%s7 + $0x84] sm:$0xf]
    %v932 = vld [vmem:[%s7 + $0x88] sm:$0xf]
    %v933 = vld [vmem:[%s7 + $0x8c] sm:$0xf]
    %v934 = vld [vmem:[%s7 + $0x90] sm:$0xf]
    %v935 = vld [vmem:[%s7 + $0x94] sm:$0x3]
    %v936 = vld [vmem:[%s8] sm:$0x1]
    %v938 = vperm.slane %v936, 0
    %v978 = vunpack.c.l.b16 %v898
    %v979 = vunpack.c.l.b16 %v899
    %v980 = vunpack.c.l.b16 %v900
    %v981 = vunpack.c.l.b16 %v901
    %v982 = vunpack.c.l.b16 %v902
    %v983 = vunpack.c.l.b16 %v903
    %v984 = vunpack.c.l.b16 %v904
    %v985 = vunpack.c.l.b16 %v905
    %v986 = vunpack.c.l.b16 %v906
    %v987 = vunpack.c.l.b16 %v907
    %v988 = vunpack.c.l.b16 %v908
    %v989 = vunpack.c.l.b16 %v909
    %v990 = vunpack.c.l.b16 %v910
    %v991 = vunpack.c.l.b16 %v911
    %v992 = vunpack.c.l.b16 %v912
    %v993 = vunpack.c.l.b16 %v913
    %v994 = vunpack.c.l.b16 %v914
    %v995 = vunpack.c.l.b16 %v915
    %v996 = vunpack.c.l.b16 %v916
    %v997 = vunpack.c.l.b16 %v917
    %v998 = vunpack.c.l.b16 %v918
    %v999 = vunpack.c.l.b16 %v919
    %v1000 = vunpack.c.l.b16 %v920
    %v1001 = vunpack.c.l.b16 %v921
    %v1002 = vunpack.c.l.b16 %v922
    %v1003 = vunpack.c.l.b16 %v923
    %v1004 = vunpack.c.l.b16 %v924
    %v1005 = vunpack.c.l.b16 %v925
    %v1006 = vunpack.c.l.b16 %v926
    %v1007 = vunpack.c.l.b16 %v927
    %v1008 = vunpack.c.l.b16 %v928
    %v1009 = vunpack.c.l.b16 %v929
    %v1010 = vunpack.c.l.b16 %v930
    %v1011 = vunpack.c.l.b16 %v931
    %v1012 = vunpack.c.l.b16 %v932
    %v1013 = vunpack.c.l.b16 %v933
    %v1014 = vunpack.c.l.b16 %v934
    %v1015 = vunpack.c.l.b16 %v935
    %v1016 = vpack.c.b16 %v979, %v978
    %v1017 = vpack.c.b16 %v981, %v980
    %v1018 = vpack.c.b16 %v983, %v982
    %v1019 = vpack.c.b16 %v985, %v984
    %v1020 = vpack.c.b16 %v987, %v986
    %v1021 = vpack.c.b16 %v989, %v988
    %v1022 = vpack.c.b16 %v991, %v990
    %v1023 = vpack.c.b16 %v993, %v992
    %v1024 = vpack.c.b16 %v995, %v994
    %v1025 = vpack.c.b16 %v997, %v996
    %v1026 = vpack.c.b16 %v999, %v998
    %v1027 = vpack.c.b16 %v1001, %v1000
    %v1028 = vpack.c.b16 %v1003, %v1002
    %v1029 = vpack.c.b16 %v1005, %v1004
    %v1030 = vpack.c.b16 %v1007, %v1006
    %v1031 = vpack.c.b16 %v1009, %v1008
    %v1032 = vpack.c.b16 %v1011, %v1010
    %v1033 = vpack.c.b16 %v1013, %v1012
    %v1034 = vpack.c.b16 %v1015, %v1014
    %vm1053 = vcmask 359424
    %v1055 = vsel %vm1053, %v897, 0
    %vm1057 = vcmask 1045504
    %v1059 = vsel %vm1057, %v1034, 0
    %1061 = vmatpush.bf16.msra.mxu0 %v1023
    %1062 = vmatpush.bf16.msra.mxu0 %v1022
    %1063 = vmatpush.bf16.msra.mxu0 %v1021
    %1064 = vmatpush.bf16.msra.mxu0 %v1020
    %1065 = vmatpush.bf16.msra.mxu0 %v1019
    %1066 = vmatpush.bf16.msra.mxu0 %v1018
    %1067 = vmatpush.bf16.msra.mxu0 %v1017
    %1068 = vmatpush.bf16.msra.mxu0 %v1016
    %1069 = vmatmul.bf16.gmra.mxu0 %v895
    %v1070 = vpop.f32.mrf.mxu0
    %v1071 = vadd.f32 %v938, %v1070
    %v1072 = vpop.f32.mrf.mxu0
    %1073 = vdwg.mxu0
    %1074 = vmatpush.bf16.msra.mxu0 %v1031
    %1075 = vmatpush.bf16.msra.mxu0 %v1030
    %1076 = vmatpush.bf16.msra.mxu0 %v1029
    %1077 = vmatpush.bf16.msra.mxu0 %v1028
    %1078 = vmatpush.bf16.msra.mxu0 %v1027
    %1079 = vmatpush.bf16.msra.mxu0 %v1026
    %1080 = vmatpush.bf16.msra.mxu0 %v1025
    %1081 = vmatpush.bf16.msra.mxu0 %v1024
    %1082 = vmatmul.bf16.gmra.mxu0 %v896
    %v1083 = vpop.f32.mrf.mxu0
    %v1084 = vadd.f32 %v1071, %v1083
    %v1085 = vpop.f32.mrf.mxu0
    %1086 = vdwg.mxu0
    %1087 = vmatpush.bf16.msra.mxu0 0
    %1088 = vmatpush.bf16.msra.mxu0 0
    %1089 = vmatpush.bf16.msra.mxu0 0
    %1090 = vmatpush.bf16.msra.mxu0 0
    %1091 = vmatpush.bf16.msra.mxu0 0
    %1092 = vmatpush.bf16.msra.mxu0 %v1059
    %1093 = vmatpush.bf16.msra.mxu0 %v1033
    %1094 = vmatpush.bf16.msra.mxu0 %v1032
    %1095 = vmatmul.bf16.gmra.mxu0 %v1055
    %v1096 = vpop.f32.mrf.mxu0
    %v1097 = vadd.f32 %v1084, %v1096
    %v1098 = vpop.f32.mrf.mxu0
    %1099 = vdwg.mxu0
    %v1100 = vtanh.pop %v1097
    %v1101 = vmul.f32 %v1100, 0.05
    %v1102 = vadd.f32 %v1101, %v51
    %v1103 = vmax.f32 %v1102, -1.0
    %v1104 = vmin.f32 %v1103, 1.0
    %vm1105 = vcmask 25600
    %1106 = vst.msk [vmem:[#allocation5] sm:$0x3] %vm1105, %v1104
    // Predicated region
    $region42: #{tpu_custom_call.1} parent=1 // pred_check
      _
    $region43: #{tpu_custom_call.1} parent=1 // pred_check_branch
      %1108 = sbr.rel (0) target = $region45
    $region44: #{tpu_custom_call.1} parent=1 // pred_region
      %1110 = vsyncadd [#allocation4], 0
      %s1112 = sshll.u32 [#allocation5], 4
      %s1113 = int_to_ptr.vmem [resolvable:$true] %s1112
      %s1114 = sshll.u32 %s9, 4
      %s1115 = int_to_ptr.hbm [resolvable:$true] %s1114
      %1117 = dma.vmem_to_hbm [thread:$0]  %s1113, 32, %s1115, [#allocation4]
    $region45: #{tpu_custom_call.1} parent=1 // pred_fallthru
      _
    // Predicated region
    $region46: #{tpu_custom_call.1} parent=1 // pred_check
      _
    $region47: #{tpu_custom_call.1} parent=1 // pred_check_branch
      %1119 = sbr.rel (0) target = $region49
    $region48: #{tpu_custom_call.1} parent=1 // pred_region
      %1121 = dma.done [#allocation4], 32
    $region49: #{tpu_custom_call.1} parent=1 // pred_fallthru
      _
    %1122 = vsyncpa [#allocation3], 1
    %1123 = vsyncpa [#allocation4], 1

</llo_original>
